<compile_context>
chip_gen: v7x
topology: tpu7x:2x2x1
jax: 0.10.0
libtpu: 0.0.40
codegen_flags: <defaults>
</compile_context>

<pallas_src>
import jax
import jax.numpy as jnp
from jax.experimental import pallas as pl
from jax.experimental.pallas import tpu as pltpu


def mlp_kernel(x_ref, w1_ref, b1_ref, w2_ref, b2_ref, o_ref):
    """Feature-major MLP forward, specialized for n_in == 1 and n_out == 1.

    x_ref : (1, B)        input row (batch on the lane axis)
    w1_ref: (n_hid, 1)    hidden-layer weight column (PyTorch (out,in) layout)
    b1_ref: (n_hid, 1)    hidden-layer bias column
    w2_ref: (n_hid, 1)    output-layer weight column (W2 transposed)
    b2_ref: (1, 1)        output-layer bias
    o_ref : (1, B)        output row
    """
    x = x_ref[...]          # (1, B)
    w1 = w1_ref[...]        # (n_hid, 1)
    b1 = b1_ref[...]        # (n_hid, 1)
    w2 = w2_ref[...]        # (n_hid, 1)
    b2 = b2_ref[...]        # (1, 1)

    # Layer 1: broadcast outer product on the VPU (no MXU), then ReLU.
    # (n_hid, 1) * (1, B) -> (n_hid, B)
    h = jnp.maximum(w1 * x + b1, 0.0)

    # Layer 2: elementwise multiply + sublane reduce over the hidden axis,
    # then bias. (n_hid, 1) * (n_hid, B) -> sum over axis 0 -> (1, B).
    o = jnp.sum(w2 * h, axis=0, keepdims=True) + b2

    o_ref[...] = o.astype(o_ref.dtype)


def net_forward(x, w1, b1, w2, b2):
    """Forward pass of Net (Linear -> ReLU -> Linear), PyTorch parameter layout.

    x : (B, n_in)          with n_in == 1
    w1: (n_hid, n_in)      hidden_layer.weight
    b1: (n_hid,)           hidden_layer.bias
    w2: (n_out, n_hid)     output_layer.weight, n_out == 1
    b2: (n_out,)           output_layer.bias
    Returns (B, n_out) float32.
    """
    B, n_in = x.shape
    n_hid, _ = w1.shape
    n_out = w2.shape[0]
    assert n_in == 1 and n_out == 1, (
        "kernel is specialized for Net(n_input=1, ..., n_output=1) "
        "as used in 优化器比较.py")

    # Feature-major / lane-dense layout: batch on the 128-lane axis.
    x_t = x.T.astype(jnp.float32)                  # (1, B)
    w1_c = w1.astype(jnp.float32)                  # (n_hid, 1) already column
    b1_c = b1.reshape(n_hid, 1).astype(jnp.float32)
    w2_c = w2.T.astype(jnp.float32)                # (n_hid, 1)
    b2_c = b2.reshape(1, 1).astype(jnp.float32)

    vmem_spec = pl.BlockSpec(memory_space=pltpu.MemorySpace.VMEM)
    out_t = pl.pallas_call(
        mlp_kernel,
        out_shape=jax.ShapeDtypeStruct((1, B), jnp.float32),
        in_specs=[vmem_spec] * 5,
        out_specs=vmem_spec,
    )(x_t, w1_c, b1_c, w2_c, b2_c)

    return out_t.T                                  # (B, 1)


def reference_forward(x, w1, b1, w2, b2):
    h = jnp.maximum(x @ w1.T + b1, 0.0)
    return h @ w2.T + b2


if __name__ == "__main__":
    # Small shapes consistent with the module: Net(n_input=1, n_hidden=32, n_output=1);
    # batch = 128 so the lane axis is exactly full.
    B, n_in, n_hid, n_out = 128, 1, 32, 1

    key = jax.random.PRNGKey(0)
    k_w1, k_b1, k_w2, k_b2 = jax.random.split(key, 4)

    # Input mimics torch.unsqueeze(torch.linspace(-1, 1, B), dim=1)
    x = jnp.linspace(-1.0, 1.0, B, dtype=jnp.float32).reshape(B, n_in)

    # Parameters in PyTorch Linear convention: weight (out, in), bias (out,).
    w1 = jax.random.uniform(k_w1, (n_hid, n_in), jnp.float32, -1.0, 1.0)
    b1 = jax.random.uniform(k_b1, (n_hid,), jnp.float32, -1.0, 1.0)
    w2 = jax.random.uniform(k_w2, (n_out, n_hid), jnp.float32, -0.2, 0.2)
    b2 = jax.random.uniform(k_b2, (n_out,), jnp.float32, -0.2, 0.2)

    out = net_forward(x, w1, b1, w2, b2)
    out = jax.block_until_ready(out)

    ref = reference_forward(x, w1, b1, w2, b2)
    assert out.shape == (B, n_out)
    assert jnp.allclose(out, ref, atol=1e-5, rtol=1e-5), "mismatch vs reference"

    print("KERNEL_OK")
</pallas_src>

<mosaic_0001>
module attributes {stable_mosaic.version = 11 : i64} {
  func.func @mlp_kernel(%arg0: memref<1x128xf32, #tpu.memory_space<vmem>>, %arg1: memref<32x1xf32, #tpu.memory_space<vmem>>, %arg2: memref<32x1xf32, #tpu.memory_space<vmem>>, %arg3: memref<32x1xf32, #tpu.memory_space<vmem>>, %arg4: memref<1x1xf32, #tpu.memory_space<vmem>>, %arg5: memref<1x128xf32, #tpu.memory_space<vmem>>) attributes {dimension_semantics = [], scalar_prefetch = 0 : i64, scratch_operands = 0 : i64, tpu.core_type = #tpu.core_type<tc>} {
    %c0 = arith.constant 0 : index
    %c0_0 = arith.constant 0 : index
    %0 = vector.load %arg0[%c0, %c0_0] : memref<1x128xf32, #tpu.memory_space<vmem>>, vector<1x128xf32>
    %c0_1 = arith.constant 0 : index
    %c0_2 = arith.constant 0 : index
    %1 = vector.load %arg1[%c0_1, %c0_2] : memref<32x1xf32, #tpu.memory_space<vmem>>, vector<32x1xf32>
    %c0_3 = arith.constant 0 : index
    %c0_4 = arith.constant 0 : index
    %2 = vector.load %arg2[%c0_3, %c0_4] : memref<32x1xf32, #tpu.memory_space<vmem>>, vector<32x1xf32>
    %c0_5 = arith.constant 0 : index
    %c0_6 = arith.constant 0 : index
    %3 = vector.load %arg3[%c0_5, %c0_6] : memref<32x1xf32, #tpu.memory_space<vmem>>, vector<32x1xf32>
    %c0_7 = arith.constant 0 : index
    %c0_8 = arith.constant 0 : index
    %4 = vector.load %arg4[%c0_7, %c0_8] : memref<1x1xf32, #tpu.memory_space<vmem>>, vector<1x1xf32>
    %5 = vector.broadcast %1 : vector<32x1xf32> to vector<32x128xf32>
    %6 = vector.broadcast %0 : vector<1x128xf32> to vector<32x128xf32>
    %7 = arith.mulf %5, %6 : vector<32x128xf32>
    %8 = vector.broadcast %2 : vector<32x1xf32> to vector<32x128xf32>
    %9 = arith.addf %7, %8 : vector<32x128xf32>
    %cst = arith.constant 0.000000e+00 : f32
    %10 = vector.broadcast %cst : f32 to vector<32x128xf32>
    %11 = arith.maximumf %9, %10 : vector<32x128xf32>
    %12 = vector.broadcast %3 : vector<32x1xf32> to vector<32x128xf32>
    %13 = arith.mulf %12, %11 : vector<32x128xf32>
    %cst_9 = arith.constant dense<0.000000e+00> : vector<128xf32>
    %14 = vector.multi_reduction <add>, %13, %cst_9 [0] : vector<32x128xf32> to vector<128xf32>
    %15 = vector.shape_cast %14 : vector<128xf32> to vector<1x128xf32>
    %16 = vector.broadcast %4 : vector<1x1xf32> to vector<1x128xf32>
    %17 = arith.addf %15, %16 : vector<1x128xf32>
    %c0_10 = arith.constant 0 : index
    %c0_11 = arith.constant 0 : index
    %18 = vector.load %arg5[%c0_10, %c0_11] : memref<1x128xf32, #tpu.memory_space<vmem>>, vector<1x128xf32>
    tpu.vector_store %arg5[%c0_10, %c0_11], %17 {strides = array<i32>} : memref<1x128xf32, #tpu.memory_space<vmem>>, vector<1x128xf32>,
    return
  }
}

</mosaic_0001>

<llo_original>
// kernel: tpu_custom_call.1
$region0: #{tpu_custom_call.1}
  #allocation0 [shape = 'u32[]', space=smem, size = 0x4, offset = 0x4, fixed_abs, tag = 'smem constant byte address 0x4 - core index']
  #allocation1 [shape = 'u32[144,128]{1,0:T(1,128)}', space=vmem, size = 0x12000, scoped, tag = 'internal scratch']
  #allocation2 [shape = 'f32[1,1]{1,0:T(1,128)S(1)}', space=vmem, size = 0x200, scoped, tag = 'scoped memory for tpu_custom_call.1']
  %s0 = inlined_call_operand.vmem [shape: f32[1,128], index: 0, kind: input, shape index: {}]
  %s1 = inlined_call_operand.vmem [shape: f32[32,1], index: 1, kind: input, shape index: {}]
  %s2 = inlined_call_operand.vmem [shape: f32[32,1], index: 2, kind: input, shape index: {}]
  %s3 = inlined_call_operand.vmem [shape: f32[32,1], index: 3, kind: input, shape index: {}]
  %s4 = inlined_call_operand.<no memory space> [shape: f32[1,1], index: 4, kind: input, shape index: {}]
  %s5 = inlined_call_operand.hbm [shape: f32[1,128], index: 5, kind: output, shape index: {}]
  %s6 = sld [smem:[#allocation0]]
  $region30: #{tpu_custom_call.1} parent=0
    _
  %s8 = ssub.s32 1, %s6
  %s9 = scalar_select 0, %s8, %s6
  %v10 = vstv %s4
  %11 = vst [vmem:[#allocation2] sm:$0x1] %v10
  $region1: #{tpu_custom_call.1} parent=0
    #allocation3 [shape = 'u8[512]{0}', space=vmem, size = 0x400, scoped, tag = 'output window, operand 0, single buffered']
    #allocation4 [shape = 's32[1]{0}', space=sflag, size = 0x4, scoped, tag = 'scoped memory for tpu_custom_call.1']
    %12 = vsyncpa [#allocation4], 0
    // Predicated region
    $region2: #{tpu_custom_call.1} parent=1 // pred_check
      _
    $region3: #{tpu_custom_call.1} parent=1 // pred_check_branch
      %14 = sbr.rel (0) target = $region5
    $region4: #{tpu_custom_call.1} parent=1 // pred_region
      _
    $region5: #{tpu_custom_call.1} parent=1 // pred_fallthru
      _
    // Predicated region
    $region6: #{tpu_custom_call.1} parent=1 // pred_check
      _
    $region7: #{tpu_custom_call.1} parent=1 // pred_check_branch
      %16 = sbr.rel (0) target = $region9
    $region8: #{tpu_custom_call.1} parent=1 // pred_region
      _
    $region9: #{tpu_custom_call.1} parent=1 // pred_fallthru
      _
    // Predicated region
    $region10: #{tpu_custom_call.1} parent=1 // pred_check
      _
    $region11: #{tpu_custom_call.1} parent=1 // pred_check_branch
      %18 = sbr.rel (0) target = $region13
    $region12: #{tpu_custom_call.1} parent=1 // pred_region
      _
    $region13: #{tpu_custom_call.1} parent=1 // pred_fallthru
      _
    // Predicated region
    $region14: #{tpu_custom_call.1} parent=1 // pred_check
      _
    $region15: #{tpu_custom_call.1} parent=1 // pred_check_branch
      %20 = sbr.rel (0) target = $region17
    $region16: #{tpu_custom_call.1} parent=1 // pred_region
      _
    $region17: #{tpu_custom_call.1} parent=1 // pred_fallthru
      _
    // Predicated region
    $region18: #{tpu_custom_call.1} parent=1 // pred_check
      _
    $region19: #{tpu_custom_call.1} parent=1 // pred_check_branch
      %22 = sbr.rel (0) target = $region21
    $region20: #{tpu_custom_call.1} parent=1 // pred_region
      _
    $region21: #{tpu_custom_call.1} parent=1 // pred_fallthru
      _
    %v23 = vld [vmem:[%s0] sm:$0x1]
    %v24 = vld [vmem:[%s1] sm:$0xff]
    %v25 = vld [vmem:[%s1 + $0x8] sm:$0xff]
    %v26 = vld [vmem:[%s1 + $0x10] sm:$0xff]
    %v27 = vld [vmem:[%s1 + $0x18] sm:$0xff]
    %v28 = vld [vmem:[%s2] sm:$0xff]
    %v29 = vld [vmem:[%s2 + $0x8] sm:$0xff]
    %v30 = vld [vmem:[%s2 + $0x10] sm:$0xff]
    %v31 = vld [vmem:[%s2 + $0x18] sm:$0xff]
    %v32 = vld [vmem:[%s3] sm:$0xff]
    %v33 = vld [vmem:[%s3 + $0x8] sm:$0xff]
    %v34 = vld [vmem:[%s3 + $0x10] sm:$0xff]
    %v35 = vld [vmem:[%s3 + $0x18] sm:$0xff]
    %v36 = vld [vmem:[#allocation2] sm:$0x1]
    %38 = vset.pattern.permute.xlu0 0
    %39 = vperm.xlu0 %38, %v24
    %v40 = vpop.permute.xlu0 %39
    %43 = vset.pattern.permute.xlu0 0
    %44 = vperm.xlu0 %43, %v25
    %v45 = vpop.permute.xlu0 %44
    %48 = vset.pattern.permute.xlu0 0
    %49 = vperm.xlu0 %48, %v26
    %v50 = vpop.permute.xlu0 %49
    %53 = vset.pattern.permute.xlu0 0
    %54 = vperm.xlu0 %53, %v27
    %v55 = vpop.permute.xlu0 %54
    %v58 = vlaneseq
    %v59 = vshrl.u32 %v58, 7
    %v60 = vsub.s32 0, %v59
    %v61 = vrot.slane %v23, %v60
    %v63 = vmul.f32 %v40, %v61
    %v64 = vmul.f32 %v45, %v61
    %v65 = vmul.f32 %v50, %v61
    %v66 = vmul.f32 %v55, %v61
    %68 = vset.pattern.permute.xlu0 0
    %69 = vperm.xlu0 %68, %v28
    %v70 = vpop.permute.xlu0 %69
    %73 = vset.pattern.permute.xlu0 0
    %74 = vperm.xlu0 %73, %v29
    %v75 = vpop.permute.xlu0 %74
    %78 = vset.pattern.permute.xlu0 0
    %79 = vperm.xlu0 %78, %v30
    %v80 = vpop.permute.xlu0 %79
    %83 = vset.pattern.permute.xlu0 0
    %84 = vperm.xlu0 %83, %v31
    %v85 = vpop.permute.xlu0 %84
    %v87 = vadd.f32 %v63, %v70
    %v88 = vadd.f32 %v64, %v75
    %v89 = vadd.f32 %v65, %v80
    %v90 = vadd.f32 %v66, %v85
    %v91 = vmax.f32 %v87, 0.0
    %v92 = vmax.f32 %v88, 0.0
    %v93 = vmax.f32 %v89, 0.0
    %v94 = vmax.f32 %v90, 0.0
    %96 = vset.pattern.permute.xlu0 0
    %97 = vperm.xlu0 %96, %v32
    %v98 = vpop.permute.xlu0 %97
    %101 = vset.pattern.permute.xlu0 0
    %102 = vperm.xlu0 %101, %v33
    %v103 = vpop.permute.xlu0 %102
    %106 = vset.pattern.permute.xlu0 0
    %107 = vperm.xlu0 %106, %v34
    %v108 = vpop.permute.xlu0 %107
    %111 = vset.pattern.permute.xlu0 0
    %112 = vperm.xlu0 %111, %v35
    %v113 = vpop.permute.xlu0 %112
    %v115 = vmul.f32 %v98, %v91
    %v116 = vmul.f32 %v103, %v92
    %v117 = vmul.f32 %v108, %v93
    %v118 = vmul.f32 %v113, %v94
    %v119 = vadd.f32 %v115, %v116
    %v120 = vadd.f32 %v119, %v117
    %v121 = vadd.f32 %v120, %v118
    %v122 = vrot.slane %v121, 4
    %v123 = vadd.f32 %v121, %v122
    %v124 = vrot.slane %v123, 2
    %v125 = vadd.f32 %v123, %v124
    %v126 = vrot.slane %v125, 1
    %v127 = vadd.f32 %v125, %v126
    %129 = vset.pattern.permute.xlu0 0
    %130 = vperm.xlu0 %129, %v36
    %v131 = vpop.permute.xlu0 %130
    %v133 = vlaneseq
    %v134 = vshrl.u32 %v133, 7
    %v135 = vsub.s32 0, %v134
    %v136 = vrot.slane %v131, %v135
    %v137 = vadd.f32 %v127, %v136
    %138 = vst [vmem:[#allocation3] sm:$0x1] %v137
    // Predicated region
    $region22: #{tpu_custom_call.1} parent=1 // pred_check
      _
    $region23: #{tpu_custom_call.1} parent=1 // pred_check_branch
      %140 = sbr.rel (0) target = $region25
    $region24: #{tpu_custom_call.1} parent=1 // pred_region
      %s142 = ssub.s32 16, 16
      %143 = vsyncadd [#allocation4], %s142
      %s145 = sshll.u32 [#allocation3], 4
      %s146 = int_to_ptr.vmem [resolvable:$true] %s145
      %148 = dma.vmem_to_hbm [thread:$0]  %s146, 16, %s5, [#allocation4]
    $region25: #{tpu_custom_call.1} parent=1 // pred_fallthru
      _
    // Predicated region
    $region26: #{tpu_custom_call.1} parent=1 // pred_check
      _
    $region27: #{tpu_custom_call.1} parent=1 // pred_check_branch
      %150 = sbr.rel (0) target = $region29
    $region28: #{tpu_custom_call.1} parent=1 // pred_region
      %151 = dma.done [#allocation4], 16
    $region29: #{tpu_custom_call.1} parent=1 // pred_fallthru
      _
    %152 = vsyncpa [#allocation4], 1

</llo_original>
